<compile_context>
chip_gen: v7x
topology: tpu7x:2x2x1
jax: 0.10.0
libtpu: 0.0.40
codegen_flags: <defaults>
</compile_context>

<pallas_src>
import jax
import jax.numpy as jnp
from jax.experimental import pallas as pl
from jax.experimental.pallas import tpu as pltpu

_SUBLANE = 8  # f32 sublane granularity


def _dqn_kernel(x_ref, w1_ref, b1_ref, w2_ref, b2_ref, w3_ref, b3_ref, o_ref):
    """One (TM, K) activation tile -> (TM, A) output tile, fully in VMEM.

    Three MXU matmuls with f32 accumulation; bias + ReLU epilogue in f32 (VPU).
    The cast of activations to the operand dtype (f32 or bf16) happens here on
    the VPU, which has slack under the MXU/DMA -- never in the wrapper.
    """
    op_dtype = w1_ref.dtype
    x = x_ref[...].astype(op_dtype)
    h1 = jnp.dot(x, w1_ref[...], preferred_element_type=jnp.float32) + b1_ref[...]
    h1 = jnp.maximum(h1, 0.0)
    h2 = jnp.dot(h1.astype(op_dtype), w2_ref[...],
                 preferred_element_type=jnp.float32) + b2_ref[...]
    h2 = jnp.maximum(h2, 0.0)
    out = jnp.dot(h2.astype(op_dtype), w3_ref[...],
                  preferred_element_type=jnp.float32) + b3_ref[...]
    o_ref[...] = out.astype(o_ref.dtype)


def _round_up(n, m):
    return ((n + m - 1) // m) * m


def _num_tensorcores():
    """Best-effort detection of TensorCores per chip (v7x has 2)."""
    try:
        kind = jax.devices()[0].device_kind.lower()
        if "v7" in kind or "7x" in kind:
            return 2
    except Exception:  # pragma: no cover - defensive only
        pass
    return 1


def prepare_params(params, *, compute_dtype=jnp.float32):
    """One-time weight prep (do this at init, NOT per forward call).

    Casts the matmul weights to the MXU operand dtype (bf16 recommended on
    v6e/v7x); biases stay f32 because they are added after f32 accumulation.
    """
    return {
        "w1": params["w1"].astype(compute_dtype),
        "w2": params["w2"].astype(compute_dtype),
        "w3": params["w3"].astype(compute_dtype),
        "b1": params["b1"].astype(jnp.float32),
        "b2": params["b2"].astype(jnp.float32),
        "b3": params["b3"].astype(jnp.float32),
    }


def dqn_forward(x, prepared, *, block_m=512, num_cores=None):
    """x: (B, state_size) float32. prepared: output of prepare_params()."""
    w1, b1 = prepared["w1"], prepared["b1"]
    w2, b2 = prepared["w2"], prepared["b2"]
    w3, b3 = prepared["w3"], prepared["b3"]

    B, K = x.shape
    H = w1.shape[1]
    A = w3.shape[1]

    if num_cores is None:
        num_cores = _num_tensorcores()

    # --- batch tile: amortize per-step overhead, but give every TensorCore a
    # block when the chip has more than one (v7x). No padding of x: Pallas
    # handles the partial last block (OOB output rows are masked on write).
    tm = block_m
    if B <= tm:
        tm = max(_SUBLANE, _round_up(-(-B // num_cores), _SUBLANE))
    grid = (pl.cdiv(B, tm),)

    # NOTE: weights/biases use constant index_maps so they stay VMEM-resident
    # across all grid steps. (pipeline_mode=pl.Buffered(1) would shave their
    # double-buffer copy, but the ~75 KB saving is negligible here.)
    out = pl.pallas_call(
        _dqn_kernel,
        out_shape=jax.ShapeDtypeStruct((B, A), jnp.float32),
        grid=grid,
        in_specs=[
            pl.BlockSpec((tm, K), lambda i: (i, 0)),    # x tile (streamed)
            pl.BlockSpec((K, H), lambda i: (0, 0)),     # w1 (resident)
            pl.BlockSpec((1, H), lambda i: (0, 0)),     # b1 (resident)
            pl.BlockSpec((H, H), lambda i: (0, 0)),     # w2 (resident)
            pl.BlockSpec((1, H), lambda i: (0, 0)),     # b2 (resident)
            pl.BlockSpec((H, A), lambda i: (0, 0)),     # w3 (resident, unpadded)
            pl.BlockSpec((1, A), lambda i: (0, 0)),     # b3 (resident, unpadded)
        ],
        # Last dim A equals the full array dim -> (8,128) rule satisfied without
        # padding; writeback is exactly B*A*4 bytes.
        out_specs=pl.BlockSpec((tm, A), lambda i: (i, 0)),
        compiler_params=pltpu.CompilerParams(
            dimension_semantics=("parallel",),  # megacore-shard the batch (v7x)
        ),
    )(x, w1, b1, w2, b2, w3, b3)

    return out


def init_params(key, state_size, hidden, action_size):
    """Deterministic init mimicking nn.Linear's uniform(-1/sqrt(fan_in), +)."""
    ks = jax.random.split(key, 6)

    def lin(kw, kb, fan_in, fan_out):
        bound = 1.0 / jnp.sqrt(jnp.float32(fan_in))
        w = jax.random.uniform(kw, (fan_in, fan_out), jnp.float32, -bound, bound)
        b = jax.random.uniform(kb, (1, fan_out), jnp.float32, -bound, bound)
        return w, b

    w1, b1 = lin(ks[0], ks[1], state_size, hidden)
    w2, b2 = lin(ks[2], ks[3], hidden, hidden)
    w3, b3 = lin(ks[4], ks[5], hidden, action_size)
    return {"w1": w1, "b1": b1, "w2": w2, "b2": b2, "w3": w3, "b3": b3}


def dqn_reference(x, p):
    h1 = jnp.maximum(x @ p["w1"] + p["b1"], 0.0)
    h2 = jnp.maximum(h1 @ p["w2"] + p["b2"], 0.0)
    return h2 @ p["w3"] + p["b3"]


if __name__ == "__main__":
    state_size, hidden, action_size, batch = 16, 128, 4, 2
    key = jax.random.PRNGKey(0)
    kx, kp, kx2 = jax.random.split(key, 3)
    params = init_params(kp, state_size, hidden, action_size)

    # One-time weight prep (f32 path and bf16 fast path).
    prep_f32 = prepare_params(params, compute_dtype=jnp.float32)
    prep_bf16 = prepare_params(params, compute_dtype=jnp.bfloat16)

    # 1) Small-batch smoke test (f32 operands), matching the PyTorch module shapes.
    x = jax.random.normal(kx, (batch, state_size), jnp.float32)
    out = jax.block_until_ready(dqn_forward(x, prep_f32))
    ref = dqn_reference(x, params)
    assert out.shape == (batch, action_size)
    assert jnp.allclose(out, ref, atol=1e-5, rtol=1e-5), "f32 small-batch mismatch"

    # 2) Batched, non-multiple-of-tile path: exercises the ragged grid (masked
    #    partial last block) and resident weights.
    xb = jax.random.normal(kx2, (300, state_size), jnp.float32)
    outb = jax.block_until_ready(dqn_forward(xb, prep_f32))
    refb = dqn_reference(xb, params)
    assert outb.shape == (300, action_size)
    assert jnp.allclose(outb, refb, atol=1e-4, rtol=1e-4), "f32 batched mismatch"

    # 3) bf16 matmul operands (v6e/v7x fast path), f32 accumulation + epilogue.
    outb16 = jax.block_until_ready(dqn_forward(xb, prep_bf16))
    assert jnp.allclose(outb16, refb, atol=1e-1, rtol=1e-1), "bf16 batched mismatch"

    # 4) Force a multi-step grid (as on v7x with 2 TensorCores) to exercise the
    #    parallel batch split regardless of the chip this runs on.
    outb2 = jax.block_until_ready(dqn_forward(xb, prep_f32, num_cores=2))
    assert jnp.allclose(outb2, refb, atol=1e-4, rtol=1e-4), "multi-core grid mismatch"

    print("KERNEL_OK")
</pallas_src>

<mosaic_0001>
module attributes {stable_mosaic.version = 11 : i64} {
  func.func @_dqn_kernel(%arg0: i32, %arg1: memref<8x16xf32, #tpu.memory_space<vmem>>, %arg2: memref<16x128xf32, #tpu.memory_space<vmem>>, %arg3: memref<1x128xf32, #tpu.memory_space<vmem>>, %arg4: memref<128x128xf32, #tpu.memory_space<vmem>>, %arg5: memref<1x128xf32, #tpu.memory_space<vmem>>, %arg6: memref<128x4xf32, #tpu.memory_space<vmem>>, %arg7: memref<1x4xf32, #tpu.memory_space<vmem>>, %arg8: memref<8x4xf32, #tpu.memory_space<vmem>>) attributes {dimension_semantics = [#tpu.dimension_semantics<parallel>], iteration_bounds = array<i64: 1>, scalar_prefetch = 0 : i64, scratch_operands = 0 : i64, tpu.core_type = #tpu.core_type<tc>, window_params = [{transform_indices = @transform_0, window_bounds = array<i64: 8, 16>}, {pipeline_mode = #tpu.pipeline_mode<synchronous>, transform_indices = @transform_1, window_bounds = array<i64: 16, 128>}, {pipeline_mode = #tpu.pipeline_mode<synchronous>, transform_indices = @transform_2, window_bounds = array<i64: 1, 128>}, {pipeline_mode = #tpu.pipeline_mode<synchronous>, transform_indices = @transform_3, window_bounds = array<i64: 128, 128>}, {pipeline_mode = #tpu.pipeline_mode<synchronous>, transform_indices = @transform_4, window_bounds = array<i64: 1, 128>}, {pipeline_mode = #tpu.pipeline_mode<synchronous>, transform_indices = @transform_5, window_bounds = array<i64: 128, 4>}, {pipeline_mode = #tpu.pipeline_mode<synchronous>, transform_indices = @transform_6, window_bounds = array<i64: 1, 4>}, {transform_indices = @transform_7, window_bounds = array<i64: 8, 4>}]} {
    %c0 = arith.constant 0 : index
    %c0_0 = arith.constant 0 : index
    %0 = vector.load %arg1[%c0, %c0_0] : memref<8x16xf32, #tpu.memory_space<vmem>>, vector<8x16xf32>
    %c0_1 = arith.constant 0 : index
    %c0_2 = arith.constant 0 : index
    %1 = vector.load %arg2[%c0_1, %c0_2] : memref<16x128xf32, #tpu.memory_space<vmem>>, vector<16x128xf32>
    %cst = arith.constant dense<0.000000e+00> : vector<8x128xf32>
    %2 = tpu.matmul %0, %1, %cst {dimension_numbers = #tpu.dot_dimension_numbers<[1], [0], [0], [1], [0, 0, 1, 1], [], []>} : vector<8x16xf32>, vector<16x128xf32>, vector<8x128xf32> -> vector<8x128xf32>
    %c0_3 = arith.constant 0 : index
    %c0_4 = arith.constant 0 : index
    %3 = vector.load %arg3[%c0_3, %c0_4] : memref<1x128xf32, #tpu.memory_space<vmem>>, vector<1x128xf32>
    %4 = vector.broadcast %3 : vector<1x128xf32> to vector<8x128xf32>
    %5 = arith.addf %2, %4 : vector<8x128xf32>
    %cst_5 = arith.constant 0.000000e+00 : f32
    %6 = vector.broadcast %cst_5 : f32 to vector<8x128xf32>
    %7 = arith.maximumf %5, %6 : vector<8x128xf32>
    %c0_6 = arith.constant 0 : index
    %c0_7 = arith.constant 0 : index
    %8 = vector.load %arg4[%c0_6, %c0_7] : memref<128x128xf32, #tpu.memory_space<vmem>>, vector<128x128xf32>
    %cst_8 = arith.constant dense<0.000000e+00> : vector<8x128xf32>
    %9 = tpu.matmul %7, %8, %cst_8 {dimension_numbers = #tpu.dot_dimension_numbers<[1], [0], [0], [1], [0, 0, 1, 1], [], []>} : vector<8x128xf32>, vector<128x128xf32>, vector<8x128xf32> -> vector<8x128xf32>
    %c0_9 = arith.constant 0 : index
    %c0_10 = arith.constant 0 : index
    %10 = vector.load %arg5[%c0_9, %c0_10] : memref<1x128xf32, #tpu.memory_space<vmem>>, vector<1x128xf32>
    %11 = vector.broadcast %10 : vector<1x128xf32> to vector<8x128xf32>
    %12 = arith.addf %9, %11 : vector<8x128xf32>
    %cst_11 = arith.constant 0.000000e+00 : f32
    %13 = vector.broadcast %cst_11 : f32 to vector<8x128xf32>
    %14 = arith.maximumf %12, %13 : vector<8x128xf32>
    %c0_12 = arith.constant 0 : index
    %c0_13 = arith.constant 0 : index
    %15 = vector.load %arg6[%c0_12, %c0_13] : memref<128x4xf32, #tpu.memory_space<vmem>>, vector<128x4xf32>
    %cst_14 = arith.constant dense<0.000000e+00> : vector<8x4xf32>
    %16 = tpu.matmul %14, %15, %cst_14 {dimension_numbers = #tpu.dot_dimension_numbers<[1], [0], [0], [1], [0, 0, 1, 1], [], []>} : vector<8x128xf32>, vector<128x4xf32>, vector<8x4xf32> -> vector<8x4xf32>
    %c0_15 = arith.constant 0 : index
    %c0_16 = arith.constant 0 : index
    %17 = vector.load %arg7[%c0_15, %c0_16] : memref<1x4xf32, #tpu.memory_space<vmem>>, vector<1x4xf32>
    %18 = vector.broadcast %17 : vector<1x4xf32> to vector<8x4xf32>
    %19 = arith.addf %16, %18 : vector<8x4xf32>
    %c0_17 = arith.constant 0 : index
    %c0_18 = arith.constant 0 : index
    %20 = vector.load %arg8[%c0_17, %c0_18] : memref<8x4xf32, #tpu.memory_space<vmem>>, vector<8x4xf32>
    tpu.vector_store %arg8[%c0_17, %c0_18], %19 {strides = array<i32>} : memref<8x4xf32, #tpu.memory_space<vmem>>, vector<8x4xf32>,
    return
  }
  func.func @transform_0(%arg0: i32) -> (i32, i32) {
    %c0_i32 = arith.constant 0 : i32
    %c0_i32_0 = arith.constant 0 : i32
    return %arg0, %c0_i32 : i32, i32
  }
  func.func @transform_1(%arg0: i32) -> (i32, i32) {
    %c0_i32 = arith.constant 0 : i32
    %c0_i32_0 = arith.constant 0 : i32
    %c0_i32_1 = arith.constant 0 : i32
    return %c0_i32, %c0_i32_0 : i32, i32
  }
  func.func @transform_2(%arg0: i32) -> (i32, i32) {
    %c0_i32 = arith.constant 0 : i32
    %c0_i32_0 = arith.constant 0 : i32
    %c0_i32_1 = arith.constant 0 : i32
    return %c0_i32, %c0_i32_0 : i32, i32
  }
  func.func @transform_3(%arg0: i32) -> (i32, i32) {
    %c0_i32 = arith.constant 0 : i32
    %c0_i32_0 = arith.constant 0 : i32
    %c0_i32_1 = arith.constant 0 : i32
    return %c0_i32, %c0_i32_0 : i32, i32
  }
  func.func @transform_4(%arg0: i32) -> (i32, i32) {
    %c0_i32 = arith.constant 0 : i32
    %c0_i32_0 = arith.constant 0 : i32
    %c0_i32_1 = arith.constant 0 : i32
    return %c0_i32, %c0_i32_0 : i32, i32
  }
  func.func @transform_5(%arg0: i32) -> (i32, i32) {
    %c0_i32 = arith.constant 0 : i32
    %c0_i32_0 = arith.constant 0 : i32
    %c0_i32_1 = arith.constant 0 : i32
    return %c0_i32, %c0_i32_0 : i32, i32
  }
  func.func @transform_6(%arg0: i32) -> (i32, i32) {
    %c0_i32 = arith.constant 0 : i32
    %c0_i32_0 = arith.constant 0 : i32
    %c0_i32_1 = arith.constant 0 : i32
    return %c0_i32, %c0_i32_0 : i32, i32
  }
  func.func @transform_7(%arg0: i32) -> (i32, i32) {
    %c0_i32 = arith.constant 0 : i32
    %c0_i32_0 = arith.constant 0 : i32
    return %arg0, %c0_i32 : i32, i32
  }
}

</mosaic_0001>

<llo_original>
// kernel: tpu_custom_call.1
$region0: #{tpu_custom_call.1}
  #allocation0 [shape = 'u32[]', space=smem, size = 0x4, offset = 0x4, fixed_abs, tag = 'smem constant byte address 0x4 - core index']
  #allocation1 [shape = 'u32[144,128]{1,0:T(1,128)}', space=vmem, size = 0x12000, scoped, tag = 'internal scratch']
  %s0 = inlined_call_operand.vmem [shape: f32[2,16], index: 0, kind: input, shape index: {}]
  %s1 = inlined_call_operand.hbm [shape: f32[16,128], index: 1, kind: input, shape index: {}]
  %s2 = inlined_call_operand.vmem [shape: f32[1,128], index: 2, kind: input, shape index: {}]
  %s3 = inlined_call_operand.vmem [shape: f32[128,128], index: 3, kind: input, shape index: {}]
  %s4 = inlined_call_operand.vmem [shape: f32[1,128], index: 4, kind: input, shape index: {}]
  %s5 = inlined_call_operand.vmem [shape: f32[128,4], index: 5, kind: input, shape index: {}]
  %s6 = inlined_call_operand.vmem [shape: f32[1,4], index: 6, kind: input, shape index: {}]
  %s7 = inlined_call_operand.hbm [shape: f32[2,4], index: 7, kind: output, shape index: {}]
  %s8 = sld [smem:[#allocation0]]
  $region42: #{tpu_custom_call.1} parent=0
    _
  %s10 = ssub.s32 1, %s8
  %s11 = scalar_select 0, %s10, %s8
  $region1: #{tpu_custom_call.1} parent=0
    #allocation2 [shape = 'u8[8192]{0}', space=vmem, size = 0x2000, scoped, tag = 'input window, operand 1, single buffered']
    #allocation3 [shape = 's32[1]{0}', space=sflag, size = 0x4, scoped, tag = 'scoped memory for tpu_custom_call.1']
    #allocation4 [shape = 's32[1]{0}', space=sflag, size = 0x4, scoped, tag = 'scoped memory for tpu_custom_call.1']
    #allocation5 [shape = 'u8[4096]{0}', space=vmem, size = 0x1000, scoped, tag = 'output window, operand 0, single buffered']
    %12 = vsyncpa [#allocation3], 0
    %13 = vsyncpa [#allocation4], 0
    // Predicated region
    $region2: #{tpu_custom_call.1} parent=1 // pred_check
      _
    $region3: #{tpu_custom_call.1} parent=1 // pred_check_branch
      %15 = sbr.rel (0) target = $region5
    $region4: #{tpu_custom_call.1} parent=1 // pred_region
      _
    $region5: #{tpu_custom_call.1} parent=1 // pred_fallthru
      _
    // Predicated region
    $region6: #{tpu_custom_call.1} parent=1 // pred_check
      _
    $region7: #{tpu_custom_call.1} parent=1 // pred_check_branch
      %17 = sbr.rel (0) target = $region9
    $region8: #{tpu_custom_call.1} parent=1 // pred_region
      %s19 = ssub.s32 256, 256
      %20 = vsyncadd [#allocation3], %s19
      %s21 = sshll.u32 [#allocation2], 4
      %s22 = int_to_ptr.vmem [resolvable:$true] %s21
      %27 = dma.hbm_to_vmem [thread:$0]  %s1, 256, %s22, [#allocation3], 128, 128, 8
    $region9: #{tpu_custom_call.1} parent=1 // pred_fallthru
      _
    // Predicated region
    $region10: #{tpu_custom_call.1} parent=1 // pred_check
      _
    $region11: #{tpu_custom_call.1} parent=1 // pred_check_branch
      %29 = sbr.rel (0) target = $region13
    $region12: #{tpu_custom_call.1} parent=1 // pred_region
      _
    $region13: #{tpu_custom_call.1} parent=1 // pred_fallthru
      _
    // Predicated region
    $region14: #{tpu_custom_call.1} parent=1 // pred_check
      _
    $region15: #{tpu_custom_call.1} parent=1 // pred_check_branch
      %31 = sbr.rel (0) target = $region17
    $region16: #{tpu_custom_call.1} parent=1 // pred_region
      _
    $region17: #{tpu_custom_call.1} parent=1 // pred_fallthru
      _
    // Predicated region
    $region18: #{tpu_custom_call.1} parent=1 // pred_check
      _
    $region19: #{tpu_custom_call.1} parent=1 // pred_check_branch
      %33 = sbr.rel (0) target = $region21
    $region20: #{tpu_custom_call.1} parent=1 // pred_region
      _
    $region21: #{tpu_custom_call.1} parent=1 // pred_fallthru
      _
    // Predicated region
    $region22: #{tpu_custom_call.1} parent=1 // pred_check
      _
    $region23: #{tpu_custom_call.1} parent=1 // pred_check_branch
      %35 = sbr.rel (0) target = $region25
    $region24: #{tpu_custom_call.1} parent=1 // pred_region
      _
    $region25: #{tpu_custom_call.1} parent=1 // pred_fallthru
      _
    // Predicated region
    $region26: #{tpu_custom_call.1} parent=1 // pred_check
      _
    $region27: #{tpu_custom_call.1} parent=1 // pred_check_branch
      %37 = sbr.rel (0) target = $region29
    $region28: #{tpu_custom_call.1} parent=1 // pred_region
      _
    $region29: #{tpu_custom_call.1} parent=1 // pred_fallthru
      _
    // Predicated region
    $region30: #{tpu_custom_call.1} parent=1 // pred_check
      _
    $region31: #{tpu_custom_call.1} parent=1 // pred_check_branch
      %39 = sbr.rel (0) target = $region33
    $region32: #{tpu_custom_call.1} parent=1 // pred_region
      %40 = dma.done [#allocation3], 256
    $region33: #{tpu_custom_call.1} parent=1 // pred_fallthru
      _
    %v41 = vld [vmem:[%s0] sm:$0xff]
    %v42 = vld [vmem:[#allocation2] sm:$0xff]
    %v43 = vld [vmem:[#allocation2 + $0x8] sm:$0xff]
    %v44 = vld [vmem:[%s2] sm:$0x1]
    %v46 = vlaneseq
    %v47 = vshrl.u32 %v46, 7
    %v48 = vsub.s32 0, %v47
    %v49 = vrot.slane %v44, %v48
    %vm51 = vcmask 130048
    %v53 = vsel %vm51, %v41, 0
    %55 = vmatprep.subr.mxu0 0.0
    %56 = vmatpush1.msra.mxu0 %v42
    %57 = vmatprep.subr.mxu0 0.0
    %58 = vmatpush1.msra.mxu0 %v43
    %59 = vmatprep.subr.mxu0 0.0
    %60 = vmatpush1.msra.mxu0 0.0
    %61 = vmatprep.subr.mxu0 0.0
    %62 = vmatpush1.msra.mxu0 0.0
    %63 = vmatprep.subr.mxu0 0.0
    %64 = vmatpush1.msra.mxu0 0.0
    %65 = vmatprep.subr.mxu0 0.0
    %66 = vmatpush1.msra.mxu0 0.0
    %67 = vmatprep.subr.mxu0 0.0
    %68 = vmatpush1.msra.mxu0 0.0
    %69 = vmatprep.subr.mxu0 0.0
    %70 = vmatpush1.msra.mxu0 0.0
    %71 = vmatprep.subr.mxu0 0.0
    %72 = vmatpush1.msra.mxu0 0.0
    %73 = vmatprep.subr.mxu0 0.0
    %74 = vmatpush1.msra.mxu0 0.0
    %75 = vmatprep.subr.mxu0 0.0
    %76 = vmatpush1.msra.mxu0 0.0
    %77 = vmatprep.subr.mxu0 0.0
    %78 = vmatpush1.msra.mxu0 0.0
    %79 = vmatprep.subr.mxu0 0.0
    %80 = vmatpush1.msra.mxu0 0.0
    %81 = vmatprep.subr.mxu0 0.0
    %82 = vmatpush1.msra.mxu0 0.0
    %83 = vmatprep.subr.mxu0 0.0
    %84 = vmatpush1.msra.mxu0 0.0
    %85 = vmatprep.subr.mxu0 0.0
    %86 = vmatpush1.msra.mxu0 0.0
    %87 = vmatprep.subr.mxu0 0.0
    %88 = vmatpush1.msra.mxu0 0.0
    %89 = vmatprep.subr.mxu0 0.0
    %90 = vmatpush1.msra.mxu0 0.0
    %91 = vmatprep.subr.mxu0 0.0
    %92 = vmatpush1.msra.mxu0 0.0
    %93 = vmatprep.subr.mxu0 0.0
    %94 = vmatpush1.msra.mxu0 0.0
    %95 = vmatprep.subr.mxu0 0.0
    %96 = vmatpush1.msra.mxu0 0.0
    %97 = vmatprep.subr.mxu0 0.0
    %98 = vmatpush1.msra.mxu0 0.0
    %99 = vmatprep.subr.mxu0 0.0
    %100 = vmatpush1.msra.mxu0 0.0
    %101 = vmatprep.subr.mxu0 0.0
    %102 = vmatpush1.msra.mxu0 0.0
    %103 = vmatprep.subr.mxu0 0.0
    %104 = vmatpush1.msra.mxu0 0.0
    %105 = vmatprep.subr.mxu0 0.0
    %106 = vmatpush1.msra.mxu0 0.0
    %107 = vmatprep.subr.mxu0 0.0
    %108 = vmatpush1.msra.mxu0 0.0
    %109 = vmatprep.subr.mxu0 0.0
    %110 = vmatpush1.msra.mxu0 0.0
    %111 = vmatprep.subr.mxu0 0.0
    %112 = vmatpush1.msra.mxu0 0.0
    %113 = vmatprep.subr.mxu0 0.0
    %114 = vmatpush1.msra.mxu0 0.0
    %115 = vmatprep.subr.mxu0 0.0
    %116 = vmatpush1.msra.mxu0 0.0
    %117 = vmatprep.subr.mxu0 0.0
    %118 = vmatpush1.msra.mxu0 0.0
    %119 = vmatprep.mubr.f32.mxu0 0.0
    %120 = vmatmul.mubr.f32.gmra.mrb[0].mxu0 %v53
    %v121 = vpop.f32.mrb[0].mxu0
    %v122 = vadd.f32 %v49, %v121
    %v123 = vpop.f32.mrb[0].mxu0
    %124 = vdwg.mxu0
    %v125 = vmax.f32 %v122, 0.0
    %v126 = vld [vmem:[%s3] sm:$0xff]
    %v127 = vld [vmem:[%s3 + $0x8] sm:$0xff]
    %v128 = vld [vmem:[%s3 + $0x10] sm:$0xff]
    %v129 = vld [vmem:[%s3 + $0x18] sm:$0xff]
    %v130 = vld [vmem:[%s3 + $0x20] sm:$0xff]
    %v131 = vld [vmem:[%s3 + $0x28] sm:$0xff]
    %v132 = vld [vmem:[%s3 + $0x30] sm:$0xff]
    %v133 = vld [vmem:[%s3 + $0x38] sm:$0xff]
    %v134 = vld [vmem:[%s3 + $0x40] sm:$0xff]
    %v135 = vld [vmem:[%s3 + $0x48] sm:$0xff]
    %v136 = vld [vmem:[%s3 + $0x50] sm:$0xff]
    %v137 = vld [vmem:[%s3 + $0x58] sm:$0xff]
    %v138 = vld [vmem:[%s3 + $0x60] sm:$0xff]
    %v139 = vld [vmem:[%s3 + $0x68] sm:$0xff]
    %v140 = vld [vmem:[%s3 + $0x70] sm:$0xff]
    %v141 = vld [vmem:[%s3 + $0x78] sm:$0xff]
    %v142 = vld [vmem:[%s4] sm:$0x1]
    %v144 = vlaneseq
    %v145 = vshrl.u32 %v144, 7
    %v146 = vsub.s32 0, %v145
    %v147 = vrot.slane %v142, %v146
    %149 = vmatprep.subr.mxu0 0.0
    %150 = vmatpush1.msra.mxu0 %v126
    %151 = vmatprep.subr.mxu0 0.0
    %152 = vmatpush1.msra.mxu0 %v127
    %153 = vmatprep.subr.mxu0 0.0
    %154 = vmatpush1.msra.mxu0 %v128
    %155 = vmatprep.subr.mxu0 0.0
    %156 = vmatpush1.msra.mxu0 %v129
    %157 = vmatprep.subr.mxu0 0.0
    %158 = vmatpush1.msra.mxu0 %v130
    %159 = vmatprep.subr.mxu0 0.0
    %160 = vmatpush1.msra.mxu0 %v131
    %161 = vmatprep.subr.mxu0 0.0
    %162 = vmatpush1.msra.mxu0 %v132
    %163 = vmatprep.subr.mxu0 0.0
    %164 = vmatpush1.msra.mxu0 %v133
    %165 = vmatprep.subr.mxu0 0.0
    %166 = vmatpush1.msra.mxu0 %v134
    %167 = vmatprep.subr.mxu0 0.0
    %168 = vmatpush1.msra.mxu0 %v135
    %169 = vmatprep.subr.mxu0 0.0
    %170 = vmatpush1.msra.mxu0 %v136
    %171 = vmatprep.subr.mxu0 0.0
    %172 = vmatpush1.msra.mxu0 %v137
    %173 = vmatprep.subr.mxu0 0.0
    %174 = vmatpush1.msra.mxu0 %v138
    %175 = vmatprep.subr.mxu0 0.0
    %176 = vmatpush1.msra.mxu0 %v139
    %177 = vmatprep.subr.mxu0 0.0
    %178 = vmatpush1.msra.mxu0 %v140
    %179 = vmatprep.subr.mxu0 0.0
    %180 = vmatpush1.msra.mxu0 %v141
    %181 = vmatprep.subr.mxu0 0.0
    %182 = vmatpush1.msra.mxu0 0.0
    %183 = vmatprep.subr.mxu0 0.0
    %184 = vmatpush1.msra.mxu0 0.0
    %185 = vmatprep.subr.mxu0 0.0
    %186 = vmatpush1.msra.mxu0 0.0
    %187 = vmatprep.subr.mxu0 0.0
    %188 = vmatpush1.msra.mxu0 0.0
    %189 = vmatprep.subr.mxu0 0.0
    %190 = vmatpush1.msra.mxu0 0.0
    %191 = vmatprep.subr.mxu0 0.0
    %192 = vmatpush1.msra.mxu0 0.0
    %193 = vmatprep.subr.mxu0 0.0
    %194 = vmatpush1.msra.mxu0 0.0
    %195 = vmatprep.subr.mxu0 0.0
    %196 = vmatpush1.msra.mxu0 0.0
    %197 = vmatprep.subr.mxu0 0.0
    %198 = vmatpush1.msra.mxu0 0.0
    %199 = vmatprep.subr.mxu0 0.0
    %200 = vmatpush1.msra.mxu0 0.0
    %201 = vmatprep.subr.mxu0 0.0
    %202 = vmatpush1.msra.mxu0 0.0
    %203 = vmatprep.subr.mxu0 0.0
    %204 = vmatpush1.msra.mxu0 0.0
    %205 = vmatprep.subr.mxu0 0.0
    %206 = vmatpush1.msra.mxu0 0.0
    %207 = vmatprep.subr.mxu0 0.0
    %208 = vmatpush1.msra.mxu0 0.0
    %209 = vmatprep.subr.mxu0 0.0
    %210 = vmatpush1.msra.mxu0 0.0
    %211 = vmatprep.subr.mxu0 0.0
    %212 = vmatpush1.msra.mxu0 0.0
    %213 = vmatprep.mubr.f32.mxu0 0.0
    %214 = vmatmul.mubr.f32.gmra.mrb[0].mxu0 %v125
    %v215 = vpop.f32.mrb[0].mxu0
    %v216 = vadd.f32 %v147, %v215
    %v217 = vpop.f32.mrb[0].mxu0
    %218 = vdwg.mxu0
    %v219 = vmax.f32 %v216, 0.0
    %v220 = vld [vmem:[%s5] sm:$0xff]
    %v221 = vld [vmem:[%s5 + $0x8] sm:$0xff]
    %v222 = vld [vmem:[%s5 + $0x10] sm:$0xff]
    %v223 = vld [vmem:[%s5 + $0x18] sm:$0xff]
    %v224 = vld [vmem:[%s5 + $0x20] sm:$0xff]
    %v225 = vld [vmem:[%s5 + $0x28] sm:$0xff]
    %v226 = vld [vmem:[%s5 + $0x30] sm:$0xff]
    %v227 = vld [vmem:[%s5 + $0x38] sm:$0xff]
    %v228 = vld [vmem:[%s5 + $0x40] sm:$0xff]
    %v229 = vld [vmem:[%s5 + $0x48] sm:$0xff]
    %v230 = vld [vmem:[%s5 + $0x50] sm:$0xff]
    %v231 = vld [vmem:[%s5 + $0x58] sm:$0xff]
    %v232 = vld [vmem:[%s5 + $0x60] sm:$0xff]
    %v233 = vld [vmem:[%s5 + $0x68] sm:$0xff]
    %v234 = vld [vmem:[%s5 + $0x70] sm:$0xff]
    %v235 = vld [vmem:[%s5 + $0x78] sm:$0xff]
    %v236 = vld [vmem:[%s6] sm:$0x1]
    %v238 = vlaneseq
    %v239 = vshrl.u32 %v238, 7
    %v240 = vsub.s32 0, %v239
    %v241 = vrot.slane %v236, %v240
    %243 = vmatprep.subr.mxu0 0.0
    %244 = vmatpush1.msra.mxu0 %v220
    %245 = vmatprep.subr.mxu0 0.0
    %246 = vmatpush1.msra.mxu0 %v221
    %247 = vmatprep.subr.mxu0 0.0
    %248 = vmatpush1.msra.mxu0 %v222
    %249 = vmatprep.subr.mxu0 0.0
    %250 = vmatpush1.msra.mxu0 %v223
    %251 = vmatprep.subr.mxu0 0.0
    %252 = vmatpush1.msra.mxu0 %v224
    %253 = vmatprep.subr.mxu0 0.0
    %254 = vmatpush1.msra.mxu0 %v225
    %255 = vmatprep.subr.mxu0 0.0
    %256 = vmatpush1.msra.mxu0 %v226
    %257 = vmatprep.subr.mxu0 0.0
    %258 = vmatpush1.msra.mxu0 %v227
    %259 = vmatprep.subr.mxu0 0.0
    %260 = vmatpush1.msra.mxu0 %v228
    %261 = vmatprep.subr.mxu0 0.0
    %262 = vmatpush1.msra.mxu0 %v229
    %263 = vmatprep.subr.mxu0 0.0
    %264 = vmatpush1.msra.mxu0 %v230
    %265 = vmatprep.subr.mxu0 0.0
    %266 = vmatpush1.msra.mxu0 %v231
    %267 = vmatprep.subr.mxu0 0.0
    %268 = vmatpush1.msra.mxu0 %v232
    %269 = vmatprep.subr.mxu0 0.0
    %270 = vmatpush1.msra.mxu0 %v233
    %271 = vmatprep.subr.mxu0 0.0
    %272 = vmatpush1.msra.mxu0 %v234
    %273 = vmatprep.subr.mxu0 0.0
    %274 = vmatpush1.msra.mxu0 %v235
    %275 = vmatprep.subr.mxu0 0.0
    %276 = vmatpush1.msra.mxu0 0.0
    %277 = vmatprep.subr.mxu0 0.0
    %278 = vmatpush1.msra.mxu0 0.0
    %279 = vmatprep.subr.mxu0 0.0
    %280 = vmatpush1.msra.mxu0 0.0
    %281 = vmatprep.subr.mxu0 0.0
    %282 = vmatpush1.msra.mxu0 0.0
    %283 = vmatprep.subr.mxu0 0.0
    %284 = vmatpush1.msra.mxu0 0.0
    %285 = vmatprep.subr.mxu0 0.0
    %286 = vmatpush1.msra.mxu0 0.0
    %287 = vmatprep.subr.mxu0 0.0
    %288 = vmatpush1.msra.mxu0 0.0
    %289 = vmatprep.subr.mxu0 0.0
    %290 = vmatpush1.msra.mxu0 0.0
    %291 = vmatprep.subr.mxu0 0.0
    %292 = vmatpush1.msra.mxu0 0.0
    %293 = vmatprep.subr.mxu0 0.0
    %294 = vmatpush1.msra.mxu0 0.0
    %295 = vmatprep.subr.mxu0 0.0
    %296 = vmatpush1.msra.mxu0 0.0
    %297 = vmatprep.subr.mxu0 0.0
    %298 = vmatpush1.msra.mxu0 0.0
    %299 = vmatprep.subr.mxu0 0.0
    %300 = vmatpush1.msra.mxu0 0.0
    %301 = vmatprep.subr.mxu0 0.0
    %302 = vmatpush1.msra.mxu0 0.0
    %303 = vmatprep.subr.mxu0 0.0
    %304 = vmatpush1.msra.mxu0 0.0
    %305 = vmatprep.subr.mxu0 0.0
    %306 = vmatpush1.msra.mxu0 0.0
    %307 = vmatprep.mubr.f32.mxu0 0.0
    %308 = vmatmul.mubr.f32.gmra.mrb[0].mxu0 %v219
    %v309 = vpop.f32.mrb[0].mxu0
    %v310 = vadd.f32 %v241, %v309
    %v311 = vpop.f32.mrb[0].mxu0
    %312 = vdwg.mxu0
    %vm313 = vcmask 31744
    %314 = vst.msk [vmem:[#allocation5] sm:$0xff] %vm313, %v310
    // Predicated region
    $region34: #{tpu_custom_call.1} parent=1 // pred_check
      _
    $region35: #{tpu_custom_call.1} parent=1 // pred_check_branch
      %316 = sbr.rel (0) target = $region37
    $region36: #{tpu_custom_call.1} parent=1 // pred_region
      %s318 = ssub.s32 128, 32
      %319 = vsyncadd [#allocation4], %s318
      %s320 = sshll.u32 [#allocation5], 4
      %s321 = int_to_ptr.vmem [resolvable:$true] %s320
      %326 = dma.vmem_to_hbm [thread:$0]  %s321, 32, %s7, [#allocation4], 32, 32, 2
    $region37: #{tpu_custom_call.1} parent=1 // pred_fallthru
      _
    // Predicated region
    $region38: #{tpu_custom_call.1} parent=1 // pred_check
      _
    $region39: #{tpu_custom_call.1} parent=1 // pred_check_branch
      %328 = sbr.rel (0) target = $region41
    $region40: #{tpu_custom_call.1} parent=1 // pred_region
      %329 = dma.done [#allocation4], 128
    $region41: #{tpu_custom_call.1} parent=1 // pred_fallthru
      _
    %330 = vsyncpa [#allocation3], 1
    %331 = vsyncpa [#allocation4], 1

</llo_original>
